<compile_context>
chip_gen: v7x
topology: tpu7x:2x2x1
jax: 0.10.0
libtpu: 0.0.40
codegen_flags: <defaults>
</compile_context>

<pallas_src>
import functools

import jax
import jax.numpy as jnp
from jax.experimental import pallas as pl
from jax.experimental.pallas import tpu as pltpu


def _dnn_output_kernel(num_layers, logit, x_ref, *refs):
    """refs = (w0, b0, ..., w_{L-1}, b_{L-1}, w_out, b_out, o_ref)."""
    o_ref = refs[-1]
    param_refs = refs[:-1]

    h = x_ref[...].astype(jnp.float32)

    # Hidden layers: Linear + ReLU. Weights arrive in bf16; the MXU takes bf16
    # operands with f32 accumulation (preferred_element_type). Bias-add / ReLU
    # stay in f32 vregs.
    for layer in range(num_layers):
        w = param_refs[2 * layer][...]                               # (in, hidden)
        b = param_refs[2 * layer + 1][...].astype(jnp.float32)       # (1, hidden)
        h = jnp.dot(h.astype(w.dtype), w,
                    preferred_element_type=jnp.float32) + b
        h = jnp.maximum(h, 0.0)

    w_out = param_refs[2 * num_layers][...]                          # (hidden, out)
    b_out = param_refs[2 * num_layers + 1][...].astype(jnp.float32)  # (1, out)
    out_size = w_out.shape[-1]

    if out_size == 1:
        # hidden -> 1 projection as VPU multiply + XLU lane-reduce: avoids a
        # 1/128-column MXU matmul and lands the result ready for a lane-dense
        # (1, tile_n) store.
        w_row = w_out.astype(jnp.float32).reshape(1, -1)             # (1, hidden)
        out_lane = jnp.sum(h * w_row, axis=-1).reshape(1, -1) + b_out  # (1, tile_n)
    else:
        out = jnp.dot(h.astype(w_out.dtype), w_out,
                      preferred_element_type=jnp.float32) + b_out    # (tile_n, out)
        out_lane = out.T                                             # (out, tile_n)

    if not logit:
        out_lane = jax.nn.sigmoid(out_lane)

    # Lane-dense store: batch axis lives on lanes -> unmasked full-lane vst.
    o_ref[...] = out_lane.astype(o_ref.dtype)


def _choose_tile_n(n_rows, max_tile=1024):
    """Batch-tile heuristic: multiple of 128 (lane-dense output stores), capped
    at max_tile, preferring >=2 grid steps so both TensorCores on v7x get work
    under dimension_semantics=('parallel',)."""
    n128 = 128 * pl.cdiv(n_rows, 128)
    if n128 <= 128:
        return 128
    half = 128 * (n128 // 256)
    return max(128, min(max_tile, half))


def dnn_output_forward(x, params, *, num_layers, logit=True, tile_n=None,
                       stream_dtype=jnp.bfloat16):
    """Run the DNN_output forward pass as one fused Pallas kernel.

    x: (N, input_size)
    params: flat list [w0, b0, ..., w_{L-1}, b_{L-1}, w_out, b_out];
            weights are (in, out) (transposed vs. torch), biases are (1, out).
    Returns (N, output_size) float32 (logits when logit=True).
    """
    N, in_features = x.shape
    out_size = params[-1].shape[-1]

    if tile_n is None:
        tile_n = _choose_tile_n(N)
    assert tile_n % 128 == 0, "tile_n must be a multiple of 128 (lane-dense out)"

    n_pad = tile_n * pl.cdiv(N, tile_n)
    grid = (n_pad // tile_n,)

    # bf16 streaming of activations + weights (f32 accumulate in-kernel);
    # pad the ragged batch up to the tile size (sliced off below).
    x_in = x.astype(stream_dtype)
    if n_pad != N:
        x_in = jnp.pad(x_in, ((0, n_pad - N), (0, 0)))
    params_in = [p.astype(stream_dtype) if i % 2 == 0 else p.astype(jnp.float32)
                 for i, p in enumerate(params)]

    kernel = functools.partial(_dnn_output_kernel, num_layers, logit)

    # x is tiled along the batch axis; parameters are small, grid-invariant and
    # kept whole-array resident in VMEM (no per-step pipelining state).
    in_specs = [pl.BlockSpec((tile_n, in_features), lambda i: (i, 0))]
    in_specs += [pl.BlockSpec(memory_space=pltpu.MemorySpace.VMEM)
                 for _ in params_in]
    # Lane-dense output: (out_size, n_pad), batch on lanes.
    out_spec = pl.BlockSpec((out_size, tile_n), lambda i: (0, i))

    flops = 0
    for i in range(0, len(params_in), 2):
        w = params_in[i]
        flops += 2 * n_pad * w.shape[0] * w.shape[1]
    bytes_accessed = (x_in.size * x_in.dtype.itemsize
                      + n_pad * out_size * 4
                      + sum(p.size * p.dtype.itemsize for p in params_in))
    cost = pl.CostEstimate(
        flops=int(flops),
        transcendentals=0 if logit else int(n_pad * out_size),
        bytes_accessed=int(bytes_accessed),
    )

    out_lane = pl.pallas_call(
        kernel,
        out_shape=jax.ShapeDtypeStruct((out_size, n_pad), jnp.float32),
        grid_spec=pltpu.PrefetchScalarGridSpec(
            num_scalar_prefetch=0,
            grid=grid,
            in_specs=in_specs,
            out_specs=out_spec,
        ),
        compiler_params=pltpu.CompilerParams(
            dimension_semantics=("parallel",),
        ),
        cost_estimate=cost,
    )(x_in, *params_in)

    # Back to the PyTorch layout (N, out_size); drop padded rows.
    return out_lane.T[:N]


def init_dnn_output_params(key, input_size, hidden_size, output_size, num_layers):
    """Mirror DNN_output.reset_parameters (xavier-uniform-ish weights, zero
    biases). Weights are stored (in, out) = torch weight transposed."""
    sizes = []
    in_sz = input_size
    for _ in range(num_layers):
        sizes.append((in_sz, hidden_size))
        in_sz = hidden_size
    sizes.append((in_sz, output_size))

    params = []
    keys = jax.random.split(key, len(sizes))
    for k, (fan_in, fan_out) in zip(keys, sizes):
        limit = jnp.sqrt(6.0 / (fan_in + fan_out))
        w = jax.random.uniform(k, (fan_in, fan_out), jnp.float32, -limit, limit)
        b = jnp.zeros((1, fan_out), jnp.float32)
        params.extend([w, b])
    return params


def reference_forward(x, params, num_layers, logit=True,
                      stream_dtype=jnp.bfloat16):
    """Pure-JAX reference mirroring the kernel's bf16-streaming numerics."""
    f32 = jnp.float32
    h = x.astype(stream_dtype).astype(f32)
    for layer in range(num_layers):
        w = params[2 * layer].astype(stream_dtype).astype(f32)
        b = params[2 * layer + 1].astype(f32)
        h = jnp.maximum(h.astype(stream_dtype).astype(f32) @ w + b, 0.0)
    w_out = params[2 * num_layers].astype(stream_dtype).astype(f32)
    b_out = params[2 * num_layers + 1].astype(f32)
    out = h @ w_out + b_out
    return out if logit else jax.nn.sigmoid(out)


if __name__ == "__main__":
    # Shapes consistent with Model: bidirectional LSTM with hiddenSize=32
    # -> DNN input = 2*32 = 64; linearSize = 32; output = 1; nFCLayers = 2.
    num_directions = 2
    hidden_lstm = 32
    input_size = num_directions * hidden_lstm   # 64
    linear_size = 32
    output_size = 1
    n_fc_layers = 2
    batch = 300          # lattice arcs; deliberately NOT a multiple of the tile

    key = jax.random.PRNGKey(0)
    kx, kp = jax.random.split(key)
    x = jax.random.normal(kx, (batch, input_size), jnp.float32)
    params = init_dnn_output_params(kp, input_size, linear_size, output_size,
                                    n_fc_layers)

    out = dnn_output_forward(x, params, num_layers=n_fc_layers, logit=True)
    out = jax.block_until_ready(out)

    ref = reference_forward(x, params, n_fc_layers, logit=True)
    assert out.shape == (batch, output_size), out.shape
    max_err = float(jnp.max(jnp.abs(out - ref)))
    assert jnp.allclose(out, ref, atol=3e-2, rtol=3e-2), f"max_err={max_err}"

    print("KERNEL_OK")
</pallas_src>

<mosaic_0001>
module attributes {stable_mosaic.version = 11 : i64} {
  func.func @_dnn_output_kernel(%arg0: i32, %arg1: memref<128x64xbf16, #tpu.memory_space<vmem>>, %arg2: memref<64x32xbf16, #tpu.memory_space<vmem>>, %arg3: memref<1x32xf32, #tpu.memory_space<vmem>>, %arg4: memref<32x32xbf16, #tpu.memory_space<vmem>>, %arg5: memref<1x32xf32, #tpu.memory_space<vmem>>, %arg6: memref<32x1xbf16, #tpu.memory_space<vmem>>, %arg7: memref<1x1xf32, #tpu.memory_space<vmem>>, %arg8: memref<1x128xf32, #tpu.memory_space<vmem>>) attributes {dimension_semantics = [#tpu.dimension_semantics<parallel>], iteration_bounds = array<i64: 3>, scalar_prefetch = 0 : i64, scratch_operands = 0 : i64, tpu.core_type = #tpu.core_type<tc>, window_params = [{transform_indices = @transform_0, window_bounds = array<i64: 128, 64>}, {pipeline_mode = #tpu.pipeline_mode<synchronous>, transform_indices = @transform_1, window_bounds = array<i64: 64, 32>}, {pipeline_mode = #tpu.pipeline_mode<synchronous>, transform_indices = @transform_2, window_bounds = array<i64: 1, 32>}, {pipeline_mode = #tpu.pipeline_mode<synchronous>, transform_indices = @transform_3, window_bounds = array<i64: 32, 32>}, {pipeline_mode = #tpu.pipeline_mode<synchronous>, transform_indices = @transform_4, window_bounds = array<i64: 1, 32>}, {pipeline_mode = #tpu.pipeline_mode<synchronous>, transform_indices = @transform_5, window_bounds = array<i64: 32, 1>}, {pipeline_mode = #tpu.pipeline_mode<synchronous>, transform_indices = @transform_6, window_bounds = array<i64: 1, 1>}, {transform_indices = @transform_7, window_bounds = array<i64: 1, 128>}]} {
    %c0 = arith.constant 0 : index
    %c0_0 = arith.constant 0 : index
    %0 = vector.load %arg1[%c0, %c0_0] : memref<128x64xbf16, #tpu.memory_space<vmem>>, vector<128x64xbf16>
    %1 = arith.extf %0 : vector<128x64xbf16> to vector<128x64xf32>
    %c0_1 = arith.constant 0 : index
    %c0_2 = arith.constant 0 : index
    %2 = vector.load %arg2[%c0_1, %c0_2] : memref<64x32xbf16, #tpu.memory_space<vmem>>, vector<64x32xbf16>
    %c0_3 = arith.constant 0 : index
    %c0_4 = arith.constant 0 : index
    %3 = vector.load %arg3[%c0_3, %c0_4] : memref<1x32xf32, #tpu.memory_space<vmem>>, vector<1x32xf32>
    %4 = arith.truncf %1 : vector<128x64xf32> to vector<128x64xbf16>
    %cst = arith.constant dense<0.000000e+00> : vector<128x32xf32>
    %5 = tpu.matmul %4, %2, %cst {dimension_numbers = #tpu.dot_dimension_numbers<[1], [0], [0], [1], [0, 0, 1, 1], [], []>} : vector<128x64xbf16>, vector<64x32xbf16>, vector<128x32xf32> -> vector<128x32xf32>
    %6 = vector.broadcast %3 : vector<1x32xf32> to vector<128x32xf32>
    %7 = arith.addf %5, %6 : vector<128x32xf32>
    %cst_5 = arith.constant 0.000000e+00 : f32
    %8 = vector.broadcast %cst_5 : f32 to vector<128x32xf32>
    %9 = arith.maximumf %7, %8 : vector<128x32xf32>
    %c0_6 = arith.constant 0 : index
    %c0_7 = arith.constant 0 : index
    %10 = vector.load %arg4[%c0_6, %c0_7] : memref<32x32xbf16, #tpu.memory_space<vmem>>, vector<32x32xbf16>
    %c0_8 = arith.constant 0 : index
    %c0_9 = arith.constant 0 : index
    %11 = vector.load %arg5[%c0_8, %c0_9] : memref<1x32xf32, #tpu.memory_space<vmem>>, vector<1x32xf32>
    %12 = arith.truncf %9 : vector<128x32xf32> to vector<128x32xbf16>
    %cst_10 = arith.constant dense<0.000000e+00> : vector<128x32xf32>
    %13 = tpu.matmul %12, %10, %cst_10 {dimension_numbers = #tpu.dot_dimension_numbers<[1], [0], [0], [1], [0, 0, 1, 1], [], []>} : vector<128x32xbf16>, vector<32x32xbf16>, vector<128x32xf32> -> vector<128x32xf32>
    %14 = vector.broadcast %11 : vector<1x32xf32> to vector<128x32xf32>
    %15 = arith.addf %13, %14 : vector<128x32xf32>
    %cst_11 = arith.constant 0.000000e+00 : f32
    %16 = vector.broadcast %cst_11 : f32 to vector<128x32xf32>
    %17 = arith.maximumf %15, %16 : vector<128x32xf32>
    %c0_12 = arith.constant 0 : index
    %c0_13 = arith.constant 0 : index
    %18 = vector.load %arg6[%c0_12, %c0_13] : memref<32x1xbf16, #tpu.memory_space<vmem>>, vector<32x1xbf16>
    %c0_14 = arith.constant 0 : index
    %c0_15 = arith.constant 0 : index
    %19 = vector.load %arg7[%c0_14, %c0_15] : memref<1x1xf32, #tpu.memory_space<vmem>>, vector<1x1xf32>
    %20 = arith.extf %18 : vector<32x1xbf16> to vector<32x1xf32>
    %21 = vector.shape_cast %20 : vector<32x1xf32> to vector<1x32xf32>
    %22 = vector.broadcast %21 : vector<1x32xf32> to vector<128x32xf32>
    %23 = arith.mulf %17, %22 : vector<128x32xf32>
    %cst_16 = arith.constant dense<0.000000e+00> : vector<128xf32>
    %24 = vector.multi_reduction <add>, %23, %cst_16 [1] : vector<128x32xf32> to vector<128xf32>
    %25 = vector.shape_cast %24 : vector<128xf32> to vector<1x128xf32>
    %26 = vector.broadcast %19 : vector<1x1xf32> to vector<1x128xf32>
    %27 = arith.addf %25, %26 : vector<1x128xf32>
    %c0_17 = arith.constant 0 : index
    %c0_18 = arith.constant 0 : index
    %28 = vector.load %arg8[%c0_17, %c0_18] : memref<1x128xf32, #tpu.memory_space<vmem>>, vector<1x128xf32>
    tpu.vector_store %arg8[%c0_17, %c0_18], %27 {strides = array<i32>} : memref<1x128xf32, #tpu.memory_space<vmem>>, vector<1x128xf32>,
    return
  }
  func.func @transform_0(%arg0: i32) -> (i32, i32) {
    %c0_i32 = arith.constant 0 : i32
    %c0_i32_0 = arith.constant 0 : i32
    return %arg0, %c0_i32 : i32, i32
  }
  func.func @transform_1(%arg0: i32) -> (i32, i32) {
    %c0_i32 = arith.constant 0 : i32
    %c0_i32_0 = arith.constant 0 : i32
    %c0_i32_1 = arith.constant 0 : i32
    return %c0_i32, %c0_i32_0 : i32, i32
  }
  func.func @transform_2(%arg0: i32) -> (i32, i32) {
    %c0_i32 = arith.constant 0 : i32
    %c0_i32_0 = arith.constant 0 : i32
    %c0_i32_1 = arith.constant 0 : i32
    return %c0_i32, %c0_i32_0 : i32, i32
  }
  func.func @transform_3(%arg0: i32) -> (i32, i32) {
    %c0_i32 = arith.constant 0 : i32
    %c0_i32_0 = arith.constant 0 : i32
    %c0_i32_1 = arith.constant 0 : i32
    return %c0_i32, %c0_i32_0 : i32, i32
  }
  func.func @transform_4(%arg0: i32) -> (i32, i32) {
    %c0_i32 = arith.constant 0 : i32
    %c0_i32_0 = arith.constant 0 : i32
    %c0_i32_1 = arith.constant 0 : i32
    return %c0_i32, %c0_i32_0 : i32, i32
  }
  func.func @transform_5(%arg0: i32) -> (i32, i32) {
    %c0_i32 = arith.constant 0 : i32
    %c0_i32_0 = arith.constant 0 : i32
    %c0_i32_1 = arith.constant 0 : i32
    return %c0_i32, %c0_i32_0 : i32, i32
  }
  func.func @transform_6(%arg0: i32) -> (i32, i32) {
    %c0_i32 = arith.constant 0 : i32
    %c0_i32_0 = arith.constant 0 : i32
    %c0_i32_1 = arith.constant 0 : i32
    return %c0_i32, %c0_i32_0 : i32, i32
  }
  func.func @transform_7(%arg0: i32) -> (i32, i32) {
    %c0_i32 = arith.constant 0 : i32
    %c0_i32_0 = arith.constant 0 : i32
    return %c0_i32, %arg0 : i32, i32
  }
}

</mosaic_0001>

<llo_original>
// kernel: tpu_custom_call.1
$region0: #{tpu_custom_call.1}
  #allocation0 [shape = 'u32[]', space=smem, size = 0x4, offset = 0x4, fixed_abs, tag = 'smem constant byte address 0x4 - core index']
  #allocation1 [shape = 'u32[144,128]{1,0:T(1,128)}', space=vmem, size = 0x12000, scoped, tag = 'internal scratch']
  #allocation2 [shape = 'f32[1,1]{1,0:T(1,128)S(1)}', space=vmem, size = 0x200, scoped, tag = 'scoped memory for tpu_custom_call.1']
  %s0 = inlined_call_operand.vmem [shape: bf16[384,64], index: 0, kind: input, shape index: {}]
  %s1 = inlined_call_operand.vmem [shape: bf16[64,32], index: 1, kind: input, shape index: {}]
  %s2 = inlined_call_operand.vmem [shape: f32[1,32], index: 2, kind: input, shape index: {}]
  %s3 = inlined_call_operand.vmem [shape: bf16[32,32], index: 3, kind: input, shape index: {}]
  %s4 = inlined_call_operand.vmem [shape: f32[1,32], index: 4, kind: input, shape index: {}]
  %s5 = inlined_call_operand.vmem [shape: bf16[32,1], index: 5, kind: input, shape index: {}]
  %s6 = inlined_call_operand.<no memory space> [shape: f32[1,1], index: 6, kind: input, shape index: {}]
  %s7 = inlined_call_operand.hbm [shape: f32[1,384], index: 7, kind: output, shape index: {}]
  %s8 = sld [smem:[#allocation0]]
  $region61: #{tpu_custom_call.1} parent=0
    _
  %s10 = ssub.s32 1, %s8
  %s11 = scalar_select 0, %s10, %s8
  %v12 = vstv %s6
  %13 = vst [vmem:[#allocation2] sm:$0x1] %v12
  $region1: #{tpu_custom_call.1} parent=0
    #allocation3 [shape = 'u8[1024]{0}', space=vmem, size = 0x400, scoped, tag = 'output window, operand 0']
    #allocation4 [shape = 's32[2]{0}', space=sflag, size = 0x8, scoped, tag = 'scoped memory for tpu_custom_call.1']
    %14 = vsyncpa [#allocation4], 0
    %s15 = scalar_lea.sflag [#allocation4], 1
    %16 = vsyncpa %s15, 0
    loop: start=0, step=1, limit=5
    $region2: #{tpu_custom_call.1} parent=1 // loop_pre_header
      _
    $region3: #{tpu_custom_call.1} parent=1 // loop_header
      %s18 = sphi 0, %s22
      %p19 = scmp.ge.s32.totalorder %s18, 5
      %s28 = sphi 0, %s30
      %s31 = sphi 0, %s28
      %s32 = sphi 0, %s31
      %s48 = sphi 0, %s32
      %s52 = sphi 0, %s52
      %s54 = sphi 0, %s52
      %s55 = sphi 0, %s54
      %s69 = sphi 0, %s55
      %s73 = sphi 0, %s73
      %s75 = sphi 0, %s73
      %s76 = sphi 0, %s75
      %s90 = sphi 0, %s76
      %s94 = sphi 0, %s94
      %s96 = sphi 0, %s94
      %s97 = sphi 0, %s96
      %s111 = sphi 0, %s97
      %s115 = sphi 0, %s115
      %s117 = sphi 0, %s115
      %s118 = sphi 0, %s117
      %s132 = sphi 0, %s118
      %s136 = sphi 0, %s136
      %s138 = sphi 0, %s136
      %s139 = sphi 0, %s138
      %s153 = sphi 0, %s139
      %s157 = sphi 0, %s157
      %s159 = sphi 0, %s157
      %s160 = sphi 0, %s159
      %s174 = sphi 0, %s160
      %s180 = sphi 0, %s182
      %s183 = sphi 0, %s180
      %s184 = sphi 0, %s183
      %s200 = sphi 0, %s184
    $region4: #{tpu_custom_call.1} parent=1 // loop_header_branch
      %21 = sbr.rel (%p19) target = $region8
    $region5: #{tpu_custom_call.1} parent=1 // loop_body
      %s23 = ssub.s32 %s18, 1
      %s24 = ssub.s32 %s18, 2
      %s25 = sadd.s32 %s18, 1
      %s26 = ssub.s32 %s18, %s25
      %p27 = scmp.eq.s32.totalorder %s26, 0
      %s29 = sadd.s32 %s28, 1
      %s30 = scalar_select %p27, %s28, %s29
      %p33 = pneg %p27
      %p34 = scmp.eq.s32.totalorder %s18, 2
      %p35 = por %p33, %p34
      %p36 = scmp.ne.s32.totalorder %s28, %s31
      %p37 = scmp.eq.s32.totalorder %s18, 0
      %p38 = por %p36, %p37
      %p39 = scmp.ne.s32.totalorder %s28, %s31
      %p40 = scmp.eq.s32.totalorder %s23, 2
      %p41 = por %p39, %p40
      %p42 = scmp.ne.s32.totalorder %s31, %s32
      %p43 = scmp.eq.s32.totalorder %s23, 0
      %p44 = por %p42, %p43
      %p45 = scmp.ne.s32.totalorder %s31, %s32
      %p46 = scmp.eq.s32.totalorder %s24, 2
      %p47 = por %p45, %p46
      %p49 = scmp.ne.s32.totalorder %s32, %s48
      %p50 = scmp.eq.s32.totalorder %s24, 0
      %p51 = por %p49, %p50
      %s53 = sadd.s32 %s52, 1
      %p56 = scmp.eq.s32.totalorder %s18, 2
      %p57 = scmp.ne.s32.totalorder %s52, %s54
      %p58 = scmp.eq.s32.totalorder %s18, 0
      %p59 = por %p57, %p58
      %p60 = scmp.ne.s32.totalorder %s52, %s54
      %p61 = scmp.eq.s32.totalorder %s23, 2
      %p62 = por %p60, %p61
      %p63 = scmp.ne.s32.totalorder %s54, %s55
      %p64 = scmp.eq.s32.totalorder %s23, 0
      %p65 = por %p63, %p64
      %p66 = scmp.ne.s32.totalorder %s54, %s55
      %p67 = scmp.eq.s32.totalorder %s24, 2
      %p68 = por %p66, %p67
      %p70 = scmp.ne.s32.totalorder %s55, %s69
      %p71 = scmp.eq.s32.totalorder %s24, 0
      %p72 = por %p70, %p71
      %s74 = sadd.s32 %s73, 1
      %p77 = scmp.eq.s32.totalorder %s18, 2
      %p78 = scmp.ne.s32.totalorder %s73, %s75
      %p79 = scmp.eq.s32.totalorder %s18, 0
      %p80 = por %p78, %p79
      %p81 = scmp.ne.s32.totalorder %s73, %s75
      %p82 = scmp.eq.s32.totalorder %s23, 2
      %p83 = por %p81, %p82
      %p84 = scmp.ne.s32.totalorder %s75, %s76
      %p85 = scmp.eq.s32.totalorder %s23, 0
      %p86 = por %p84, %p85
      %p87 = scmp.ne.s32.totalorder %s75, %s76
      %p88 = scmp.eq.s32.totalorder %s24, 2
      %p89 = por %p87, %p88
      %p91 = scmp.ne.s32.totalorder %s76, %s90
      %p92 = scmp.eq.s32.totalorder %s24, 0
      %p93 = por %p91, %p92
      %s95 = sadd.s32 %s94, 1
      %p98 = scmp.eq.s32.totalorder %s18, 2
      %p99 = scmp.ne.s32.totalorder %s94, %s96
      %p100 = scmp.eq.s32.totalorder %s18, 0
      %p101 = por %p99, %p100
      %p102 = scmp.ne.s32.totalorder %s94, %s96
      %p103 = scmp.eq.s32.totalorder %s23, 2
      %p104 = por %p102, %p103
      %p105 = scmp.ne.s32.totalorder %s96, %s97
      %p106 = scmp.eq.s32.totalorder %s23, 0
      %p107 = por %p105, %p106
      %p108 = scmp.ne.s32.totalorder %s96, %s97
      %p109 = scmp.eq.s32.totalorder %s24, 2
      %p110 = por %p108, %p109
      %p112 = scmp.ne.s32.totalorder %s97, %s111
      %p113 = scmp.eq.s32.totalorder %s24, 0
      %p114 = por %p112, %p113
      %s116 = sadd.s32 %s115, 1
      %p119 = scmp.eq.s32.totalorder %s18, 2
      %p120 = scmp.ne.s32.totalorder %s115, %s117
      %p121 = scmp.eq.s32.totalorder %s18, 0
      %p122 = por %p120, %p121
      %p123 = scmp.ne.s32.totalorder %s115, %s117
      %p124 = scmp.eq.s32.totalorder %s23, 2
      %p125 = por %p123, %p124
      %p126 = scmp.ne.s32.totalorder %s117, %s118
      %p127 = scmp.eq.s32.totalorder %s23, 0
      %p128 = por %p126, %p127
      %p129 = scmp.ne.s32.totalorder %s117, %s118
      %p130 = scmp.eq.s32.totalorder %s24, 2
      %p131 = por %p129, %p130
      %p133 = scmp.ne.s32.totalorder %s118, %s132
      %p134 = scmp.eq.s32.totalorder %s24, 0
      %p135 = por %p133, %p134
      %s137 = sadd.s32 %s136, 1
      %p140 = scmp.eq.s32.totalorder %s18, 2
      %p141 = scmp.ne.s32.totalorder %s136, %s138
      %p142 = scmp.eq.s32.totalorder %s18, 0
      %p143 = por %p141, %p142
      %p144 = scmp.ne.s32.totalorder %s136, %s138
      %p145 = scmp.eq.s32.totalorder %s23, 2
      %p146 = por %p144, %p145
      %p147 = scmp.ne.s32.totalorder %s138, %s139
      %p148 = scmp.eq.s32.totalorder %s23, 0
      %p149 = por %p147, %p148
      %p150 = scmp.ne.s32.totalorder %s138, %s139
      %p151 = scmp.eq.s32.totalorder %s24, 2
      %p152 = por %p150, %p151
      %p154 = scmp.ne.s32.totalorder %s139, %s153
      %p155 = scmp.eq.s32.totalorder %s24, 0
      %p156 = por %p154, %p155
      %s158 = sadd.s32 %s157, 1
      %p161 = scmp.eq.s32.totalorder %s18, 2
      %p162 = scmp.ne.s32.totalorder %s157, %s159
      %p163 = scmp.eq.s32.totalorder %s18, 0
      %p164 = por %p162, %p163
      %p165 = scmp.ne.s32.totalorder %s157, %s159
      %p166 = scmp.eq.s32.totalorder %s23, 2
      %p167 = por %p165, %p166
      %p168 = scmp.ne.s32.totalorder %s159, %s160
      %p169 = scmp.eq.s32.totalorder %s23, 0
      %p170 = por %p168, %p169
      %p171 = scmp.ne.s32.totalorder %s159, %s160
      %p172 = scmp.eq.s32.totalorder %s24, 2
      %p173 = por %p171, %p172
      %p175 = scmp.ne.s32.totalorder %s160, %s174
      %p176 = scmp.eq.s32.totalorder %s24, 0
      %p177 = por %p175, %p176
      %s178 = ssub.s32 %s18, %s25
      %p179 = scmp.eq.s32.totalorder %s178, 0
      %s181 = sadd.s32 %s180, 1
      %s182 = scalar_select %p179, %s180, %s181
      %p185 = pneg %p179
      %p186 = scmp.eq.s32.totalorder %s18, 2
      %p187 = por %p185, %p186
      %p188 = scmp.ne.s32.totalorder %s180, %s183
      %p189 = scmp.eq.s32.totalorder %s18, 0
      %p190 = por %p188, %p189
      %p191 = scmp.ne.s32.totalorder %s180, %s183
      %p192 = scmp.eq.s32.totalorder %s23, 2
      %p193 = por %p191, %p192
      %p194 = scmp.ne.s32.totalorder %s183, %s184
      %p195 = scmp.eq.s32.totalorder %s23, 0
      %p196 = por %p194, %p195
      %p197 = scmp.ne.s32.totalorder %s183, %s184
      %p198 = scmp.eq.s32.totalorder %s24, 2
      %p199 = por %p197, %p198
      %p201 = scmp.ne.s32.totalorder %s184, %s200
      %p202 = scmp.eq.s32.totalorder %s24, 0
      %p203 = por %p201, %p202
      %p204 = scmp.le.s32.totalorder 1, %s18
      %p205 = scmp.lt.s32.totalorder %s18, 4
      %p206 = pnand %p204, %p205
      %p207 = pneg %p206
      // Predicated region
      $region9: #{tpu_custom_call.1} parent=5 // pred_check
        _
      $region10: #{tpu_custom_call.1} parent=5 // pred_check_branch
        %209 = sbr.rel (%p206) target = $region12
      $region11: #{tpu_custom_call.1} parent=5 // pred_region
        %s210 = ssub.s32 %s18, 1
        // Predicated region
        $region13: #{tpu_custom_call.1} parent=11 // pred_check
          %p211 = pneg %p65
        $region14: #{tpu_custom_call.1} parent=11 // pred_check_branch
          %213 = sbr.rel (%p211) target = $region16
        $region15: #{tpu_custom_call.1} parent=11 // pred_region
          _
        $region16: #{tpu_custom_call.1} parent=11 // pred_fallthru
          _
        // Predicated region
        $region17: #{tpu_custom_call.1} parent=11 // pred_check
          %p214 = pneg %p86
        $region18: #{tpu_custom_call.1} parent=11 // pred_check_branch
          %216 = sbr.rel (%p214) target = $region20
        $region19: #{tpu_custom_call.1} parent=11 // pred_region
          _
        $region20: #{tpu_custom_call.1} parent=11 // pred_fallthru
          _
        // Predicated region
        $region21: #{tpu_custom_call.1} parent=11 // pred_check
          %p217 = pneg %p107
        $region22: #{tpu_custom_call.1} parent=11 // pred_check_branch
          %219 = sbr.rel (%p217) target = $region24
        $region23: #{tpu_custom_call.1} parent=11 // pred_region
          _
        $region24: #{tpu_custom_call.1} parent=11 // pred_fallthru
          _
        // Predicated region
        $region25: #{tpu_custom_call.1} parent=11 // pred_check
          %p220 = pneg %p128
        $region26: #{tpu_custom_call.1} parent=11 // pred_check_branch
          %222 = sbr.rel (%p220) target = $region28
        $region27: #{tpu_custom_call.1} parent=11 // pred_region
          _
        $region28: #{tpu_custom_call.1} parent=11 // pred_fallthru
          _
        // Predicated region
        $region29: #{tpu_custom_call.1} parent=11 // pred_check
          %p223 = pneg %p149
        $region30: #{tpu_custom_call.1} parent=11 // pred_check_branch
          %225 = sbr.rel (%p223) target = $region32
        $region31: #{tpu_custom_call.1} parent=11 // pred_region
          _
        $region32: #{tpu_custom_call.1} parent=11 // pred_fallthru
          _
        // Predicated region
        $region33: #{tpu_custom_call.1} parent=11 // pred_check
          %p226 = pneg %p170
        $region34: #{tpu_custom_call.1} parent=11 // pred_check_branch
          %228 = sbr.rel (%p226) target = $region36
        $region35: #{tpu_custom_call.1} parent=11 // pred_region
          _
        $region36: #{tpu_custom_call.1} parent=11 // pred_fallthru
          _
      $region12: #{tpu_custom_call.1} parent=5 // pred_fallthru
        _
      %p229 = scmp.lt.s32.totalorder %s18, 3
      // Predicated region
      $region37: #{tpu_custom_call.1} parent=5 // pred_check
        %p230 = pneg %p229
      $region38: #{tpu_custom_call.1} parent=5 // pred_check_branch
        %232 = sbr.rel (%p230) target = $region40
      $region39: #{tpu_custom_call.1} parent=5 // pred_region
        // Predicated region
        $region41: #{tpu_custom_call.1} parent=39 // pred_check
          %p233 = pneg %p38
        $region42: #{tpu_custom_call.1} parent=39 // pred_check_branch
          %235 = sbr.rel (%p233) target = $region44
        $region43: #{tpu_custom_call.1} parent=39 // pred_region
          %s236 = smul.u32 16, %s18
          %p237 = scmp.lt.s32.totalorder %s236, 47
          %s238 = scalar_select %p237, %s236, 47
          %s239 = smul.addr %s238, 4
          %s240 = scalar_lea.vmem %s0, %s239
          %s241 = smul.u32 16, %s18
        $region44: #{tpu_custom_call.1} parent=39 // pred_fallthru
          _
      $region40: #{tpu_custom_call.1} parent=5 // pred_fallthru
        _
      %p242 = scmp.le.s32.totalorder 1, %s18
      %p243 = scmp.lt.s32.totalorder %s18, 4
      %p244 = pnand %p242, %p243
      %p245 = pneg %p244
      // Predicated region
      $region45: #{tpu_custom_call.1} parent=5 // pred_check
        _
      $region46: #{tpu_custom_call.1} parent=5 // pred_check_branch
        %247 = sbr.rel (%p244) target = $region48
      $region47: #{tpu_custom_call.1} parent=5 // pred_region
        %s248 = ssub.s32 %s18, 1
        %s249 = smul.u32 16, %s23
        %p250 = scmp.lt.s32.totalorder %s249, 47
        %s251 = scalar_select %p250, %s249, 47
        %s252 = smul.addr %s251, 4
        %s253 = scalar_lea.vmem %s0, %s252
        %p254 = pneg %p44
        %p255 = pneg %p41
        %p256 = pneg %p65
        %p257 = pneg %p62
        %p258 = pneg %p86
        %p259 = pneg %p83
        %p260 = pneg %p107
        %p261 = pneg %p104
        %p262 = pneg %p128
        %p263 = pneg %p125
        %p264 = pneg %p149
        %p265 = pneg %p146
        %p266 = pneg %p170
        %p267 = pneg %p167
        %p268 = pneg %p196
        %p269 = pneg %p193
        %s270 = sand.u32 %s183, 1
        %s271 = scalar_lea.sflag [#allocation4], %s270
        %s272 = sand.u32 %s183, 1
        %s273 = scalar_lea.vmem [#allocation3], %s272
        %s274 = smul.u32 16, %s23
        %p275 = scmp.lt.s32.totalorder %s274, 47
        %s276 = scalar_select %p275, %s274, 47
        %s277 = smul.addr %s276, 4
        %s278 = scalar_lea.vmem %s0, %s277
        %s279 = smul.u32 16, %s23
        %v281 = vld [vmem:[%s278] sm:$0xf]
        %v282 = vld [vmem:[%s278 + $0x4] sm:$0xf]
        %v283 = vld [vmem:[%s278 + $0x8] sm:$0xf]
        %v284 = vld [vmem:[%s278 + $0xc] sm:$0xf]
        %v285 = vld [vmem:[%s278 + $0x10] sm:$0xf]
        %v286 = vld [vmem:[%s278 + $0x14] sm:$0xf]
        %v287 = vld [vmem:[%s278 + $0x18] sm:$0xf]
        %v288 = vld [vmem:[%s278 + $0x1c] sm:$0xf]
        %v289 = vld [vmem:[%s278 + $0x20] sm:$0xf]
        %v290 = vld [vmem:[%s278 + $0x24] sm:$0xf]
        %v291 = vld [vmem:[%s278 + $0x28] sm:$0xf]
        %v292 = vld [vmem:[%s278 + $0x2c] sm:$0xf]
        %v293 = vld [vmem:[%s278 + $0x30] sm:$0xf]
        %v294 = vld [vmem:[%s278 + $0x34] sm:$0xf]
        %v295 = vld [vmem:[%s278 + $0x38] sm:$0xf]
        %v296 = vld [vmem:[%s278 + $0x3c] sm:$0xf]
        %v297 = vld [vmem:[%s1] sm:$0xf]
        %v298 = vld [vmem:[%s1 + $0x4] sm:$0xf]
        %v299 = vld [vmem:[%s1 + $0x8] sm:$0xf]
        %v300 = vld [vmem:[%s1 + $0xc] sm:$0xf]
        %v301 = vld [vmem:[%s1 + $0x10] sm:$0xf]
        %v302 = vld [vmem:[%s1 + $0x14] sm:$0xf]
        %v303 = vld [vmem:[%s1 + $0x18] sm:$0xf]
        %v304 = vld [vmem:[%s1 + $0x1c] sm:$0xf]
        %v305 = vld [vmem:[%s2] sm:$0x1]
        %v307 = vlaneseq
        %v308 = vshrl.u32 %v307, 7
        %v309 = vsub.s32 0, %v308
        %v310 = vrot.slane %v305, %v309
        %v328 = vunpack.c.l.b16 %v281
        %v329 = vunpack.c.l.b16 %v282
        %v330 = vunpack.c.l.b16 %v283
        %v331 = vunpack.c.l.b16 %v284
        %v332 = vunpack.c.l.b16 %v285
        %v333 = vunpack.c.l.b16 %v286
        %v334 = vunpack.c.l.b16 %v287
        %v335 = vunpack.c.l.b16 %v288
        %v336 = vunpack.c.l.b16 %v289
        %v337 = vunpack.c.l.b16 %v290
        %v338 = vunpack.c.l.b16 %v291
        %v339 = vunpack.c.l.b16 %v292
        %v340 = vunpack.c.l.b16 %v293
        %v341 = vunpack.c.l.b16 %v294
        %v342 = vunpack.c.l.b16 %v295
        %v343 = vunpack.c.l.b16 %v296
        %v344 = vpack.c.b16 %v329, %v328
        %v345 = vpack.c.b16 %v331, %v330
        %v346 = vpack.c.b16 %v333, %v332
        %v347 = vpack.c.b16 %v335, %v334
        %v348 = vpack.c.b16 %v337, %v336
        %v349 = vpack.c.b16 %v339, %v338
        %v350 = vpack.c.b16 %v341, %v340
        %v351 = vpack.c.b16 %v343, %v342
        %v360 = vunpack.c.l.b16 %v297
        %v361 = vunpack.c.l.b16 %v298
        %v362 = vunpack.c.l.b16 %v299
        %v363 = vunpack.c.l.b16 %v300
        %v364 = vunpack.c.l.b16 %v301
        %v365 = vunpack.c.l.b16 %v302
        %v366 = vunpack.c.l.b16 %v303
        %v367 = vunpack.c.l.b16 %v304
        %v368 = vpack.c.b16 %v361, %v360
        %v369 = vpack.c.b16 %v363, %v362
        %v370 = vpack.c.b16 %v365, %v364
        %v371 = vpack.c.b16 %v367, %v366
        %vm376 = vcmask 523264
        %v378 = vsel %vm376, %v344, 0
        %v381 = vsel %vm376, %v345, 0
        %v384 = vsel %vm376, %v346, 0
        %v387 = vsel %vm376, %v347, 0
        %v390 = vsel %vm376, %v348, 0
        %v393 = vsel %vm376, %v349, 0
        %v396 = vsel %vm376, %v350, 0
        %v399 = vsel %vm376, %v351, 0
        %401 = vmatprep.subr.bf16.mxu0 0
        %402 = vmatpush1.bf16.msra.mxu0 %v368
        %403 = vmatprep.subr.bf16.mxu0 0
        %404 = vmatpush1.bf16.msra.mxu0 %v369
        %405 = vmatprep.subr.bf16.mxu0 0
        %406 = vmatpush1.bf16.msra.mxu0 %v370
        %407 = vmatprep.subr.bf16.mxu0 0
        %408 = vmatpush1.bf16.msra.mxu0 %v371
        %409 = vmatprep.subr.bf16.mxu0 0
        %410 = vmatpush1.bf16.msra.mxu0 0
        %411 = vmatprep.subr.bf16.mxu0 0
        %412 = vmatpush1.bf16.msra.mxu0 0
        %413 = vmatprep.subr.bf16.mxu0 0
        %414 = vmatpush1.bf16.msra.mxu0 0
        %415 = vmatprep.subr.bf16.mxu0 0
        %416 = vmatpush1.bf16.msra.mxu0 0
        %417 = vmatprep.subr.bf16.mxu0 0
        %418 = vmatpush1.bf16.msra.mxu0 0
        %419 = vmatprep.subr.bf16.mxu0 0
        %420 = vmatpush1.bf16.msra.mxu0 0
        %421 = vmatprep.subr.bf16.mxu0 0
        %422 = vmatpush1.bf16.msra.mxu0 0
        %423 = vmatprep.subr.bf16.mxu0 0
        %424 = vmatpush1.bf16.msra.mxu0 0
        %425 = vmatprep.subr.bf16.mxu0 0
        %426 = vmatpush1.bf16.msra.mxu0 0
        %427 = vmatprep.subr.bf16.mxu0 0
        %428 = vmatpush1.bf16.msra.mxu0 0
        %429 = vmatprep.subr.bf16.mxu0 0
        %430 = vmatpush1.bf16.msra.mxu0 0
        %431 = vmatprep.subr.bf16.mxu0 0
        %432 = vmatpush1.bf16.msra.mxu0 0
        %433 = vmatprep.mubr.bf16.mxu0 0
        %434 = vmatmul.mubr.bf16.gmra.mrb[0].mxu0 %v378
        %v435 = vpop.f32.mrb[0].mxu0
        %v436 = vadd.f32 %v310, %v435
        %v437 = vpop.f32.mrb[0].mxu0
        %v438 = vpop.f32.mrb[0].mxu0
        %v439 = vadd.f32 %v310, %v438
        %v440 = vpop.f32.mrb[0].mxu0
        %441 = vmatprep.mubr.bf16.mxu0 0
        %442 = vmatmul.mubr.bf16.gmra.mrb[0].mxu0 %v381
        %v443 = vpop.f32.mrb[0].mxu0
        %v444 = vadd.f32 %v310, %v443
        %v445 = vpop.f32.mrb[0].mxu0
        %v446 = vpop.f32.mrb[0].mxu0
        %v447 = vadd.f32 %v310, %v446
        %v448 = vpop.f32.mrb[0].mxu0
        %449 = vmatprep.mubr.bf16.mxu0 0
        %450 = vmatmul.mubr.bf16.gmra.mrb[0].mxu0 %v384
        %v451 = vpop.f32.mrb[0].mxu0
        %v452 = vadd.f32 %v310, %v451
        %v453 = vpop.f32.mrb[0].mxu0
        %v454 = vpop.f32.mrb[0].mxu0
        %v455 = vadd.f32 %v310, %v454
        %v456 = vpop.f32.mrb[0].mxu0
        %457 = vmatprep.mubr.bf16.mxu0 0
        %458 = vmatmul.mubr.bf16.gmra.mrb[0].mxu0 %v387
        %v459 = vpop.f32.mrb[0].mxu0
        %v460 = vadd.f32 %v310, %v459
        %v461 = vpop.f32.mrb[0].mxu0
        %v462 = vpop.f32.mrb[0].mxu0
        %v463 = vadd.f32 %v310, %v462
        %v464 = vpop.f32.mrb[0].mxu0
        %465 = vmatprep.mubr.bf16.mxu0 0
        %466 = vmatmul.mubr.bf16.gmra.mrb[0].mxu0 %v390
        %v467 = vpop.f32.mrb[0].mxu0
        %v468 = vadd.f32 %v310, %v467
        %v469 = vpop.f32.mrb[0].mxu0
        %v470 = vpop.f32.mrb[0].mxu0
        %v471 = vadd.f32 %v310, %v470
        %v472 = vpop.f32.mrb[0].mxu0
        %473 = vmatprep.mubr.bf16.mxu0 0
        %474 = vmatmul.mubr.bf16.gmra.mrb[0].mxu0 %v393
        %v475 = vpop.f32.mrb[0].mxu0
        %v476 = vadd.f32 %v310, %v475
        %v477 = vpop.f32.mrb[0].mxu0
        %v478 = vpop.f32.mrb[0].mxu0
        %v479 = vadd.f32 %v310, %v478
        %v480 = vpop.f32.mrb[0].mxu0
        %481 = vmatprep.mubr.bf16.mxu0 0
        %482 = vmatmul.mubr.bf16.gmra.mrb[0].mxu0 %v396
        %v483 = vpop.f32.mrb[0].mxu0
        %v484 = vadd.f32 %v310, %v483
        %v485 = vpop.f32.mrb[0].mxu0
        %v486 = vpop.f32.mrb[0].mxu0
        %v487 = vadd.f32 %v310, %v486
        %v488 = vpop.f32.mrb[0].mxu0
        %489 = vmatprep.mubr.bf16.mxu0 0
        %490 = vmatmul.mubr.bf16.gmra.mrb[0].mxu0 %v399
        %v491 = vpop.f32.mrb[0].mxu0
        %v492 = vadd.f32 %v310, %v491
        %v493 = vpop.f32.mrb[0].mxu0
        %v494 = vpop.f32.mrb[0].mxu0
        %v495 = vadd.f32 %v310, %v494
        %v496 = vpop.f32.mrb[0].mxu0
        %497 = vdwg.mxu0
        %v498 = vmax.f32 %v436, 0.0
        %v499 = vmax.f32 %v439, 0.0
        %v500 = vmax.f32 %v444, 0.0
        %v501 = vmax.f32 %v447, 0.0
        %v502 = vmax.f32 %v452, 0.0
        %v503 = vmax.f32 %v455, 0.0
        %v504 = vmax.f32 %v460, 0.0
        %v505 = vmax.f32 %v463, 0.0
        %v506 = vmax.f32 %v468, 0.0
        %v507 = vmax.f32 %v471, 0.0
        %v508 = vmax.f32 %v476, 0.0
        %v509 = vmax.f32 %v479, 0.0
        %v510 = vmax.f32 %v484, 0.0
        %v511 = vmax.f32 %v487, 0.0
        %v512 = vmax.f32 %v492, 0.0
        %v513 = vmax.f32 %v495, 0.0
        %v514 = vld [vmem:[%s3] sm:$0xf]
        %v515 = vld [vmem:[%s3 + $0x4] sm:$0xf]
        %v516 = vld [vmem:[%s3 + $0x8] sm:$0xf]
        %v517 = vld [vmem:[%s3 + $0xc] sm:$0xf]
        %v518 = vld [vmem:[%s4] sm:$0x1]
        %v519 = vpack.c.bf16 %v499, %v498
        %v520 = vpack.c.bf16 %v501, %v500
        %v521 = vpack.c.bf16 %v503, %v502
        %v522 = vpack.c.bf16 %v505, %v504
        %v523 = vpack.c.bf16 %v507, %v506
        %v524 = vpack.c.bf16 %v509, %v508
        %v525 = vpack.c.bf16 %v511, %v510
        %v526 = vpack.c.bf16 %v513, %v512
        %v528 = vlaneseq
        %v529 = vshrl.u32 %v528, 7
        %v530 = vsub.s32 0, %v529
        %v531 = vrot.slane %v518, %v530
        %v537 = vunpack.c.l.b16 %v514
        %v538 = vunpack.c.l.b16 %v515
        %v539 = vunpack.c.l.b16 %v516
        %v540 = vunpack.c.l.b16 %v517
        %v541 = vpack.c.b16 %v538, %v537
        %v542 = vpack.c.b16 %v540, %v539
        %vm545 = vcmask 261120
        %v547 = vsel %vm545, %v519, 0
        %v550 = vsel %vm545, %v520, 0
        %v553 = vsel %vm545, %v521, 0
        %v556 = vsel %vm545, %v522, 0
        %v559 = vsel %vm545, %v523, 0
        %v562 = vsel %vm545, %v524, 0
        %v565 = vsel %vm545, %v525, 0
        %v568 = vsel %vm545, %v526, 0
        %570 = vmatprep.subr.bf16.mxu0 0
        %571 = vmatpush1.bf16.msra.mxu0 %v541
        %572 = vmatprep.subr.bf16.mxu0 0
        %573 = vmatpush1.bf16.msra.mxu0 %v542
        %574 = vmatprep.subr.bf16.mxu0 0
        %575 = vmatpush1.bf16.msra.mxu0 0
        %576 = vmatprep.subr.bf16.mxu0 0
        %577 = vmatpush1.bf16.msra.mxu0 0
        %578 = vmatprep.subr.bf16.mxu0 0
        %579 = vmatpush1.bf16.msra.mxu0 0
        %580 = vmatprep.subr.bf16.mxu0 0
        %581 = vmatpush1.bf16.msra.mxu0 0
        %582 = vmatprep.subr.bf16.mxu0 0
        %583 = vmatpush1.bf16.msra.mxu0 0
        %584 = vmatprep.subr.bf16.mxu0 0
        %585 = vmatpush1.bf16.msra.mxu0 0
        %586 = vmatprep.subr.bf16.mxu0 0
        %587 = vmatpush1.bf16.msra.mxu0 0
        %588 = vmatprep.subr.bf16.mxu0 0
        %589 = vmatpush1.bf16.msra.mxu0 0
        %590 = vmatprep.subr.bf16.mxu0 0
        %591 = vmatpush1.bf16.msra.mxu0 0
        %592 = vmatprep.subr.bf16.mxu0 0
        %593 = vmatpush1.bf16.msra.mxu0 0
        %594 = vmatprep.subr.bf16.mxu0 0
        %595 = vmatpush1.bf16.msra.mxu0 0
        %596 = vmatprep.subr.bf16.mxu0 0
        %597 = vmatpush1.bf16.msra.mxu0 0
        %598 = vmatprep.subr.bf16.mxu0 0
        %599 = vmatpush1.bf16.msra.mxu0 0
        %600 = vmatprep.subr.bf16.mxu0 0
        %601 = vmatpush1.bf16.msra.mxu0 0
        %602 = vmatprep.mubr.bf16.mxu0 0
        %603 = vmatmul.mubr.bf16.gmra.mrb[0].mxu0 %v547
        %v604 = vpop.f32.mrb[0].mxu0
        %v605 = vadd.f32 %v531, %v604
        %v606 = vpop.f32.mrb[0].mxu0
        %v607 = vpop.f32.mrb[0].mxu0
        %v608 = vadd.f32 %v531, %v607
        %v609 = vpop.f32.mrb[0].mxu0
        %610 = vmatprep.mubr.bf16.mxu0 0
        %611 = vmatmul.mubr.bf16.gmra.mrb[0].mxu0 %v550
        %v612 = vpop.f32.mrb[0].mxu0
        %v613 = vadd.f32 %v531, %v612
        %v614 = vpop.f32.mrb[0].mxu0
        %v615 = vpop.f32.mrb[0].mxu0
        %v616 = vadd.f32 %v531, %v615
        %v617 = vpop.f32.mrb[0].mxu0
        %618 = vmatprep.mubr.bf16.mxu0 0
        %619 = vmatmul.mubr.bf16.gmra.mrb[0].mxu0 %v553
        %v620 = vpop.f32.mrb[0].mxu0
        %v621 = vadd.f32 %v531, %v620
        %v622 = vpop.f32.mrb[0].mxu0
        %v623 = vpop.f32.mrb[0].mxu0
        %v624 = vadd.f32 %v531, %v623
        %v625 = vpop.f32.mrb[0].mxu0
        %626 = vmatprep.mubr.bf16.mxu0 0
        %627 = vmatmul.mubr.bf16.gmra.mrb[0].mxu0 %v556
        %v628 = vpop.f32.mrb[0].mxu0
        %v629 = vadd.f32 %v531, %v628
        %v630 = vpop.f32.mrb[0].mxu0
        %v631 = vpop.f32.mrb[0].mxu0
        %v632 = vadd.f32 %v531, %v631
        %v633 = vpop.f32.mrb[0].mxu0
        %634 = vmatprep.mubr.bf16.mxu0 0
        %635 = vmatmul.mubr.bf16.gmra.mrb[0].mxu0 %v559
        %v636 = vpop.f32.mrb[0].mxu0
        %v637 = vadd.f32 %v531, %v636
        %v638 = vpop.f32.mrb[0].mxu0
        %v639 = vpop.f32.mrb[0].mxu0
        %v640 = vadd.f32 %v531, %v639
        %v641 = vpop.f32.mrb[0].mxu0
        %642 = vmatprep.mubr.bf16.mxu0 0
        %643 = vmatmul.mubr.bf16.gmra.mrb[0].mxu0 %v562
        %v644 = vpop.f32.mrb[0].mxu0
        %v645 = vadd.f32 %v531, %v644
        %v646 = vpop.f32.mrb[0].mxu0
        %v647 = vpop.f32.mrb[0].mxu0
        %v648 = vadd.f32 %v531, %v647
        %v649 = vpop.f32.mrb[0].mxu0
        %650 = vmatprep.mubr.bf16.mxu0 0
        %651 = vmatmul.mubr.bf16.gmra.mrb[0].mxu0 %v565
        %v652 = vpop.f32.mrb[0].mxu0
        %v653 = vadd.f32 %v531, %v652
        %v654 = vpop.f32.mrb[0].mxu0
        %v655 = vpop.f32.mrb[0].mxu0
        %v656 = vadd.f32 %v531, %v655
        %v657 = vpop.f32.mrb[0].mxu0
        %658 = vmatprep.mubr.bf16.mxu0 0
        %659 = vmatmul.mubr.bf16.gmra.mrb[0].mxu0 %v568
        %v660 = vpop.f32.mrb[0].mxu0
        %v661 = vadd.f32 %v531, %v660
        %v662 = vpop.f32.mrb[0].mxu0
        %v663 = vpop.f32.mrb[0].mxu0
        %v664 = vadd.f32 %v531, %v663
        %v665 = vpop.f32.mrb[0].mxu0
        %666 = vdwg.mxu0
        %v667 = vmax.f32 %v605, 0.0
        %v668 = vmax.f32 %v608, 0.0
        %v669 = vmax.f32 %v613, 0.0
        %v670 = vmax.f32 %v616, 0.0
        %v671 = vmax.f32 %v621, 0.0
        %v672 = vmax.f32 %v624, 0.0
        %v673 = vmax.f32 %v629, 0.0
        %v674 = vmax.f32 %v632, 0.0
        %v675 = vmax.f32 %v637, 0.0
        %v676 = vmax.f32 %v640, 0.0
        %v677 = vmax.f32 %v645, 0.0
        %v678 = vmax.f32 %v648, 0.0
        %v679 = vmax.f32 %v653, 0.0
        %v680 = vmax.f32 %v656, 0.0
        %v681 = vmax.f32 %v661, 0.0
        %v682 = vmax.f32 %v664, 0.0
        %v683 = vld [vmem:[%s5] sm:$0xf]
        %v684 = vld [vmem:[%s5 + $0x4] sm:$0xf]
        %v685 = vld [vmem:[%s5 + $0x8] sm:$0xf]
        %v686 = vld [vmem:[%s5 + $0xc] sm:$0xf]
        %v687 = vld [vmem:[#allocation2] sm:$0x1]
        %v688 = vunpack.c.l.bf16 %v683
        %v689 = vunpack.c.l.bf16 %v684
        %v690 = vunpack.c.l.bf16 %v685
        %v691 = vunpack.c.l.bf16 %v686
        %696 = vset.pattern.permute.xlu0 0
        %697 = vperm.xlu0 %696, %v688
        %v698 = vpop.permute.xlu0 %697
        %699 = vset.pattern.permute.xlu0 0
        %700 = vperm.xlu0 %699, %v689
        %v701 = vpop.permute.xlu0 %700
        %702 = vset.pattern.permute.xlu0 0
        %703 = vperm.xlu0 %702, %v690
        %v704 = vpop.permute.xlu0 %703
        %705 = vset.pattern.permute.xlu0 0
        %706 = vperm.xlu0 %705, %v691
        %v707 = vpop.permute.xlu0 %706
        %v708 = vlaneseq
        %v709 = vand.u32 %v708, 127
        %v710 = vlaneseq
        %v711 = vshrl.u32 %v710, 7
        %v712 = vsub.s32 %v709, %v711
        %v713 = vrot.slane %v698, %v712
        %v714 = vadd.s32 %v709, 4294967288
        %v715 = vlaneseq
        %v716 = vshrl.u32 %v715, 7
        %v717 = vsub.s32 %v714, %v716
        %v718 = vrot.slane %v701, %v717
        %vm719 = vcmask 130112
        %v720 = vsel %vm719, %v718, %v713
        %v721 = vadd.s32 %v709, 4294967280
        %v722 = vlaneseq
        %v723 = vshrl.u32 %v722, 7
        %v724 = vsub.s32 %v721, %v723
        %v725 = vrot.slane %v704, %v724
        %vm726 = vcmask 195712
        %v727 = vsel %vm726, %v725, %v720
        %v728 = vadd.s32 %v709, 4294967272
        %v729 = vlaneseq
        %v730 = vshrl.u32 %v729, 7
        %v731 = vsub.s32 %v728, %v730
        %v732 = vrot.slane %v707, %v731
        %vm733 = vcmask 261312
        %v734 = vsel %vm733, %v732, %v727
        %vm735 = vcmask 1042434
        %v736 = vsel %vm735, %v734, %v734
        %vm737 = vcmask 1043459
        %v738 = vsel %vm737, %v734, %v736
        %vm739 = vcmask 1044484
        %v740 = vsel %vm739, %v734, %v738
        %vm741 = vcmask 1045509
        %v742 = vsel %vm741, %v734, %v740
        %vm743 = vcmask 1046534
        %v744 = vsel %vm743, %v734, %v742
        %vm745 = vcmask 1047559
        %v746 = vsel %vm745, %v734, %v744
        %v748 = vmul.f32 %v667, %v746
        %v749 = vmul.f32 %v668, %v746
        %v750 = vmul.f32 %v669, %v746
        %v751 = vmul.f32 %v670, %v746
        %v752 = vmul.f32 %v671, %v746
        %v753 = vmul.f32 %v672, %v746
        %v754 = vmul.f32 %v673, %v746
        %v755 = vmul.f32 %v674, %v746
        %v756 = vmul.f32 %v675, %v746
        %v757 = vmul.f32 %v676, %v746
        %v758 = vmul.f32 %v677, %v746
        %v759 = vmul.f32 %v678, %v746
        %v760 = vmul.f32 %v679, %v746
        %v761 = vmul.f32 %v680, %v746
        %v762 = vmul.f32 %v681, %v746
        %v763 = vmul.f32 %v682, %v746
        %v764 = vsel %vm545, %v748, 0.0
        %765 = vadd.xlane.f32.xlu0 %v764
        %v766 = vpop.xlane.xlu0 %765
        %v767 = vsel %vm545, %v749, 0.0
        %768 = vadd.xlane.f32.xlu0 %v767
        %v769 = vpop.xlane.xlu0 %768
        %v770 = vsel %vm545, %v750, 0.0
        %771 = vadd.xlane.f32.xlu0 %v770
        %v772 = vpop.xlane.xlu0 %771
        %v773 = vsel %vm545, %v751, 0.0
        %774 = vadd.xlane.f32.xlu0 %v773
        %v775 = vpop.xlane.xlu0 %774
        %v776 = vsel %vm545, %v752, 0.0
        %777 = vadd.xlane.f32.xlu0 %v776
        %v778 = vpop.xlane.xlu0 %777
        %v779 = vsel %vm545, %v753, 0.0
        %780 = vadd.xlane.f32.xlu0 %v779
        %v781 = vpop.xlane.xlu0 %780
        %v782 = vsel %vm545, %v754, 0.0
        %783 = vadd.xlane.f32.xlu0 %v782
        %v784 = vpop.xlane.xlu0 %783
        %v785 = vsel %vm545, %v755, 0.0
        %786 = vadd.xlane.f32.xlu0 %v785
        %v787 = vpop.xlane.xlu0 %786
        %v788 = vsel %vm545, %v756, 0.0
        %789 = vadd.xlane.f32.xlu0 %v788
        %v790 = vpop.xlane.xlu0 %789
        %v791 = vsel %vm545, %v757, 0.0
        %792 = vadd.xlane.f32.xlu0 %v791
        %v793 = vpop.xlane.xlu0 %792
        %v794 = vsel %vm545, %v758, 0.0
        %795 = vadd.xlane.f32.xlu0 %v794
        %v796 = vpop.xlane.xlu0 %795
        %v797 = vsel %vm545, %v759, 0.0
        %798 = vadd.xlane.f32.xlu0 %v797
        %v799 = vpop.xlane.xlu0 %798
        %v800 = vsel %vm545, %v760, 0.0
        %801 = vadd.xlane.f32.xlu0 %v800
        %v802 = vpop.xlane.xlu0 %801
        %v803 = vsel %vm545, %v761, 0.0
        %804 = vadd.xlane.f32.xlu0 %v803
        %v805 = vpop.xlane.xlu0 %804
        %v806 = vsel %vm545, %v762, 0.0
        %807 = vadd.xlane.f32.xlu0 %v806
        %v808 = vpop.xlane.xlu0 %807
        %v809 = vsel %vm545, %v763, 0.0
        %810 = vadd.xlane.f32.xlu0 %v809
        %v811 = vpop.xlane.xlu0 %810
        %813 = vset.pattern.permute.xlu0 0
        %814 = vperm.xlu0 %813, %v687
        %v815 = vpop.permute.xlu0 %814
        %v817 = vlaneseq
        %v818 = vshrl.u32 %v817, 7
        %v819 = vsub.s32 0, %v818
        %v820 = vrot.slane %v815, %v819
        %v821 = vadd.f32 %v766, %v820
        %v822 = vadd.f32 %v769, %v820
        %v823 = vadd.f32 %v772, %v820
        %v824 = vadd.f32 %v775, %v820
        %v825 = vadd.f32 %v778, %v820
        %v826 = vadd.f32 %v781, %v820
        %v827 = vadd.f32 %v784, %v820
        %v828 = vadd.f32 %v787, %v820
        %v829 = vadd.f32 %v790, %v820
        %v830 = vadd.f32 %v793, %v820
        %v831 = vadd.f32 %v796, %v820
        %v832 = vadd.f32 %v799, %v820
        %v833 = vadd.f32 %v802, %v820
        %v834 = vadd.f32 %v805, %v820
        %v835 = vadd.f32 %v808, %v820
        %v836 = vadd.f32 %v811, %v820
        %v853 = vlaneseq
        %v854 = vshrl.u32 %v853, 7
        %v855 = vsub.s32 %v709, %v854
        %v856 = vrot.slane %v821, %v855
        %v857 = vlaneseq
        %v858 = vshrl.u32 %v857, 7
        %v859 = vsub.s32 %v714, %v858
        %v860 = vrot.slane %v822, %v859
        %v861 = vsel %vm719, %v860, %v856
        %v862 = vlaneseq
        %v863 = vshrl.u32 %v862, 7
        %v864 = vsub.s32 %v721, %v863
        %v865 = vrot.slane %v823, %v864
        %v866 = vsel %vm726, %v865, %v861
        %v867 = vlaneseq
        %v868 = vshrl.u32 %v867, 7
        %v869 = vsub.s32 %v728, %v868
        %v870 = vrot.slane %v824, %v869
        %v871 = vsel %vm733, %v870, %v866
        %v872 = vadd.s32 %v709, 4294967264
        %v873 = vlaneseq
        %v874 = vshrl.u32 %v873, 7
        %v875 = vsub.s32 %v872, %v874
        %v876 = vrot.slane %v825, %v875
        %vm877 = vcmask 326912
        %v878 = vsel %vm877, %v876, %v871
        %v879 = vadd.s32 %v709, 4294967256
        %v880 = vlaneseq
        %v881 = vshrl.u32 %v880, 7
        %v882 = vsub.s32 %v879, %v881
        %v883 = vrot.slane %v826, %v882
        %vm884 = vcmask 392512
        %v885 = vsel %vm884, %v883, %v878
        %v886 = vadd.s32 %v709, 4294967248
        %v887 = vlaneseq
        %v888 = vshrl.u32 %v887, 7
        %v889 = vsub.s32 %v886, %v888
        %v890 = vrot.slane %v827, %v889
        %vm891 = vcmask 458112
        %v892 = vsel %vm891, %v890, %v885
        %v893 = vadd.s32 %v709, 4294967240
        %v894 = vlaneseq
        %v895 = vshrl.u32 %v894, 7
        %v896 = vsub.s32 %v893, %v895
        %v897 = vrot.slane %v828, %v896
        %vm898 = vcmask 523712
        %v899 = vsel %vm898, %v897, %v892
        %v900 = vadd.s32 %v709, 4294967232
        %v901 = vlaneseq
        %v902 = vshrl.u32 %v901, 7
        %v903 = vsub.s32 %v900, %v902
        %v904 = vrot.slane %v829, %v903
        %vm905 = vcmask 589312
        %v906 = vsel %vm905, %v904, %v899
        %v907 = vadd.s32 %v709, 4294967224
        %v908 = vlaneseq
        %v909 = vshrl.u32 %v908, 7
        %v910 = vsub.s32 %v907, %v909
        %v911 = vrot.slane %v830, %v910
        %vm912 = vcmask 654912
        %v913 = vsel %vm912, %v911, %v906
        %v914 = vadd.s32 %v709, 4294967216
        %v915 = vlaneseq
        %v916 = vshrl.u32 %v915, 7
        %v917 = vsub.s32 %v914, %v916
        %v918 = vrot.slane %v831, %v917
        %vm919 = vcmask 720512
        %v920 = vsel %vm919, %v918, %v913
        %v921 = vadd.s32 %v709, 4294967208
        %v922 = vlaneseq
        %v923 = vshrl.u32 %v922, 7
        %v924 = vsub.s32 %v921, %v923
        %v925 = vrot.slane %v832, %v924
        %vm926 = vcmask 786112
        %v927 = vsel %vm926, %v925, %v920
        %v928 = vadd.s32 %v709, 4294967200
        %v929 = vlaneseq
        %v930 = vshrl.u32 %v929, 7
        %v931 = vsub.s32 %v928, %v930
        %v932 = vrot.slane %v833, %v931
        %vm933 = vcmask 851712
        %v934 = vsel %vm933, %v932, %v927
        %v935 = vadd.s32 %v709, 4294967192
        %v936 = vlaneseq
        %v937 = vshrl.u32 %v936, 7
        %v938 = vsub.s32 %v935, %v937
        %v939 = vrot.slane %v834, %v938
        %vm940 = vcmask 917312
        %v941 = vsel %vm940, %v939, %v934
        %v942 = vadd.s32 %v709, 4294967184
        %v943 = vlaneseq
        %v944 = vshrl.u32 %v943, 7
        %v945 = vsub.s32 %v942, %v944
        %v946 = vrot.slane %v835, %v945
        %vm947 = vcmask 982912
        %v948 = vsel %vm947, %v946, %v941
        %v949 = vadd.s32 %v709, 4294967176
        %v950 = vlaneseq
        %v951 = vshrl.u32 %v950, 7
        %v952 = vsub.s32 %v949, %v951
        %v953 = vrot.slane %v836, %v952
        %vm954 = vcmask 1048512
        %v955 = vsel %vm954, %v953, %v948
        %957 = vst [vmem:[%s273] sm:$0x1] %v955
        %s958 = sand.u32 %s183, 1
        %s959 = scalar_lea.sflag [#allocation4], %s958
        %s960 = sand.u32 %s183, 1
        %s961 = scalar_lea.vmem [#allocation3], %s960
        // Predicated region
        $region49: #{tpu_custom_call.1} parent=47 // pred_check
          %p962 = pneg %p193
        $region50: #{tpu_custom_call.1} parent=47 // pred_check_branch
          %964 = sbr.rel (%p962) target = $region52
        $region51: #{tpu_custom_call.1} parent=47 // pred_region
          %s966 = ssub.s32 16, 16
          %967 = vsyncadd %s959, %s966
          %s968 = smul.addr %s23, 16
          %s969 = scalar_lea.hbm %s7, %s968
          %s971 = sshll.u32 %s961, 4
          %s972 = int_to_ptr.vmem [resolvable:$true] %s971
          %974 = dma.vmem_to_hbm [thread:$0]  %s972, 16, %s969, %s959
        $region52: #{tpu_custom_call.1} parent=47 // pred_fallthru
          _
      $region48: #{tpu_custom_call.1} parent=5 // pred_fallthru
        _
      %p975 = scmp.le.s32.totalorder 2, %s18
      // Predicated region
      $region53: #{tpu_custom_call.1} parent=5 // pred_check
        %p976 = pneg %p975
      $region54: #{tpu_custom_call.1} parent=5 // pred_check_branch
        %978 = sbr.rel (%p976) target = $region56
      $region55: #{tpu_custom_call.1} parent=5 // pred_region
        %s979 = ssub.s32 %s18, 2
        // Predicated region
        $region57: #{tpu_custom_call.1} parent=55 // pred_check
          %p980 = pneg %p199
        $region58: #{tpu_custom_call.1} parent=55 // pred_check_branch
          %982 = sbr.rel (%p980) target = $region60
        $region59: #{tpu_custom_call.1} parent=55 // pred_region
          %s983 = sand.u32 %s184, 1
          %s984 = scalar_lea.sflag [#allocation4], %s983
          %s985 = sand.u32 %s184, 1
          %s986 = scalar_lea.vmem [#allocation3], %s985
          %987 = dma.done %s984, 16
        $region60: #{tpu_custom_call.1} parent=55 // pred_fallthru
          _
      $region56: #{tpu_custom_call.1} parent=5 // pred_fallthru
        _
    $region6: #{tpu_custom_call.1} parent=1 // loop_footer
      %s22 = sadd.s32 1, %s18
    $region7: #{tpu_custom_call.1} parent=1 // loop_footer_branch
      %17 = sbr.rel target = $region3
    $region8: #{tpu_custom_call.1} parent=1 // loop_exit
      _
    %988 = vsyncpa [#allocation4], 1
    %s989 = scalar_lea.sflag [#allocation4], 1
    %990 = vsyncpa %s989, 1

</llo_original>
